<compile_context>
chip_gen: v7x
topology: tpu7x:2x2x1
jax: 0.10.0
libtpu: 0.0.40
codegen_flags: <defaults>
</compile_context>

<pallas_src>
from typing import NamedTuple

import jax
import jax.numpy as jnp
from jax.experimental import pallas as pl
from jax.experimental.pallas import tpu as pltpu

_LANE = 128        # pad the fc2 action dim (in VMEM only) to a multiple of this
_NEG_BIG = -1e30   # bias of padded action columns -> softmax prob underflows to 0


class PolicyParams(NamedTuple):
    w1: jax.Array       # (S, H)
    b1: jax.Array       # (1, H) f32
    w2: jax.Array       # (H, A_pad) f32, zero-padded beyond column A
    b2: jax.Array       # (1, A_pad) f32, -1e30 beyond column A
    action_size: int    # A (static)


def _round_up(n, m):
    return ((n + m - 1) // m) * m


def _policy_kernel(x_ref, w1_ref, b1_ref, w2_ref, b2_ref, out_ref):
    x = x_ref[...]                                             # (Bb, S)

    # fc1 + ReLU (MXU matmul, f32 accumulate)
    h = jnp.dot(x, w1_ref[...], preferred_element_type=jnp.float32) + b1_ref[...]
    h = jnp.maximum(h, 0.0)

    # fc2 over the lane-padded action dim (padded columns: zero weights, -1e30 bias)
    logits = jnp.dot(h, w2_ref[...], preferred_element_type=jnp.float32) + b2_ref[...]

    # Numerically stable softmax; padded columns contribute exactly 0 to the denom
    # and never reach HBM (only the first A columns are stored).
    m = jnp.max(logits, axis=1, keepdims=True)
    e = jnp.exp(logits - m)
    denom = jnp.sum(e, axis=1, keepdims=True)

    a = out_ref.shape[-1]                                      # real action count (static)
    out_ref[...] = (e[:, :a] / denom).astype(out_ref.dtype)    # exact normalization


def prepare_policy_params(w1, b1, w2, b2):
    """One-time packing of Policy params (hoisted out of the per-call hot path).

    w1: (S, H), b1: (H,), w2: (H, A), b2: (A,)  -- transposed vs PyTorch nn.Linear.
    fc2 weight/bias are zero / -1e30 padded to a 128-lane multiple for lane-dense
    in-VMEM compute; biases are reshaped to 2-D rows.
    """
    H, A = w2.shape
    a_pad = pl.cdiv(A, _LANE) * _LANE
    w2_p = jnp.zeros((H, a_pad), jnp.float32).at[:, :A].set(w2.astype(jnp.float32))
    b2_p = jnp.full((1, a_pad), _NEG_BIG, jnp.float32).at[0, :A].set(
        b2.astype(jnp.float32))
    b1_2d = b1.reshape(1, -1).astype(jnp.float32)
    return PolicyParams(w1=w1, b1=b1_2d, w2=w2_p, b2=b2_p, action_size=int(A))


def policy_forward(x, params: PolicyParams, *, block_b=8192, single_shot_max_b=256):
    """x: (B, S) -> (B, A) float32 softmax probabilities (rows sum to 1)."""
    B, S = x.shape
    H = params.w1.shape[1]
    a_pad = params.w2.shape[1]
    A = params.action_size
    args = (x, params.w1, params.b1, params.w2, params.b2)

    if B <= single_shot_max_b:
        # Tiny batch: single invocation, everything resident in VMEM, no pipeline.
        return pl.pallas_call(
            _policy_kernel,
            out_shape=jax.ShapeDtypeStruct((B, A), jnp.float32),
            in_specs=[pl.BlockSpec(memory_space=pltpu.MemorySpace.VMEM)] * 5,
            out_specs=pl.BlockSpec(memory_space=pltpu.MemorySpace.VMEM),
        )(*args)

    # Larger batch: tile the batch dim.  Always >= 2 blocks (v7x dual-TC sharding via
    # "parallel"), rows a multiple of 8 (sublane tile), at most block_b rows per block.
    # The boundary block is clipped by Pallas: garbage rows in the last partial block
    # are computed but never stored (rows are independent -- no cross-row reduction).
    rows = max(8, min(block_b, _round_up(pl.cdiv(B, 2), 8)))
    nb = pl.cdiv(B, rows)

    return pl.pallas_call(
        _policy_kernel,
        out_shape=jax.ShapeDtypeStruct((B, A), jnp.float32),
        grid=(nb,),
        in_specs=[
            pl.BlockSpec((rows, S), lambda i: (i, 0)),   # x: tiled by batch rows
            pl.BlockSpec((S, H), lambda i: (0, 0)),      # tiny weights stay VMEM-resident
            pl.BlockSpec((1, H), lambda i: (0, 0)),
            pl.BlockSpec((H, a_pad), lambda i: (0, 0)),
            pl.BlockSpec((1, a_pad), lambda i: (0, 0)),
        ],
        out_specs=pl.BlockSpec((rows, A), lambda i: (i, 0)),  # un-padded (B, A) store
        compiler_params=pltpu.CompilerParams(
            dimension_semantics=("parallel",),
        ),
    )(*args)


def init_policy_params(key, state_size, hidden_dim, action_size):
    """Deterministic init mirroring PyTorch nn.Linear default (uniform +/- 1/sqrt(fan_in))."""
    k1, k2, k3, k4 = jax.random.split(key, 4)
    bound1 = 1.0 / jnp.sqrt(state_size)
    bound2 = 1.0 / jnp.sqrt(hidden_dim)
    w1 = jax.random.uniform(k1, (state_size, hidden_dim), jnp.float32, -bound1, bound1)
    b1 = jax.random.uniform(k2, (hidden_dim,), jnp.float32, -bound1, bound1)
    w2 = jax.random.uniform(k3, (hidden_dim, action_size), jnp.float32, -bound2, bound2)
    b2 = jax.random.uniform(k4, (action_size,), jnp.float32, -bound2, bound2)
    return w1, b1, w2, b2


if __name__ == "__main__":
    key = jax.random.PRNGKey(0)
    k_x, k_p, k_xb = jax.random.split(key, 3)

    state_size, hidden_dim, action_size = 8, 32, 4
    w1, b1, w2, b2 = init_policy_params(k_p, state_size, hidden_dim, action_size)
    params = prepare_policy_params(w1, b1, w2, b2)   # one-time packing, out of hot path

    def ref_forward(x):
        h = jnp.maximum(x @ w1 + b1, 0.0)
        return jax.nn.softmax(h @ w2 + b2, axis=1)

    # Small batch -> single-invocation whole-in-VMEM path.
    x_small = jax.random.normal(k_x, (4, state_size), jnp.float32)
    out_small = jax.block_until_ready(policy_forward(x_small, params))
    assert out_small.shape == (4, action_size)
    assert jnp.allclose(out_small, ref_forward(x_small), atol=1e-4, rtol=1e-4)
    assert jnp.allclose(jnp.sum(out_small, axis=1), 1.0, atol=1e-4)

    # Larger batch (not a multiple of the block) -> batch-tiled grid path with
    # 2 "parallel" blocks and a clipped boundary block (no wrapper pad/slice).
    x_big = jax.random.normal(k_xb, (1000, state_size), jnp.float32)
    out_big = jax.block_until_ready(policy_forward(x_big, params, block_b=512))
    assert out_big.shape == (1000, action_size)
    assert jnp.allclose(out_big, ref_forward(x_big), atol=1e-4, rtol=1e-4)
    assert jnp.allclose(jnp.sum(out_big, axis=1), 1.0, atol=1e-4)

    print("KERNEL_OK")
</pallas_src>

<mosaic_0001>
module attributes {stable_mosaic.version = 11 : i64} {
  func.func @_policy_kernel(%arg0: memref<4x8xf32, #tpu.memory_space<vmem>>, %arg1: memref<8x32xf32, #tpu.memory_space<vmem>>, %arg2: memref<1x32xf32, #tpu.memory_space<vmem>>, %arg3: memref<32x128xf32, #tpu.memory_space<vmem>>, %arg4: memref<1x128xf32, #tpu.memory_space<vmem>>, %arg5: memref<4x4xf32, #tpu.memory_space<vmem>>) attributes {dimension_semantics = [], scalar_prefetch = 0 : i64, scratch_operands = 0 : i64, tpu.core_type = #tpu.core_type<tc>} {
    %c0 = arith.constant 0 : index
    %c0_0 = arith.constant 0 : index
    %0 = vector.load %arg0[%c0, %c0_0] : memref<4x8xf32, #tpu.memory_space<vmem>>, vector<4x8xf32>
    %c0_1 = arith.constant 0 : index
    %c0_2 = arith.constant 0 : index
    %1 = vector.load %arg1[%c0_1, %c0_2] : memref<8x32xf32, #tpu.memory_space<vmem>>, vector<8x32xf32>
    %cst = arith.constant dense<0.000000e+00> : vector<4x32xf32>
    %2 = tpu.matmul %0, %1, %cst {dimension_numbers = #tpu.dot_dimension_numbers<[1], [0], [0], [1], [0, 0, 1, 1], [], []>} : vector<4x8xf32>, vector<8x32xf32>, vector<4x32xf32> -> vector<4x32xf32>
    %c0_3 = arith.constant 0 : index
    %c0_4 = arith.constant 0 : index
    %3 = vector.load %arg2[%c0_3, %c0_4] : memref<1x32xf32, #tpu.memory_space<vmem>>, vector<1x32xf32>
    %4 = vector.broadcast %3 : vector<1x32xf32> to vector<4x32xf32>
    %5 = arith.addf %2, %4 : vector<4x32xf32>
    %cst_5 = arith.constant 0.000000e+00 : f32
    %6 = vector.broadcast %cst_5 : f32 to vector<4x32xf32>
    %7 = arith.maximumf %5, %6 : vector<4x32xf32>
    %c0_6 = arith.constant 0 : index
    %c0_7 = arith.constant 0 : index
    %8 = vector.load %arg3[%c0_6, %c0_7] : memref<32x128xf32, #tpu.memory_space<vmem>>, vector<32x128xf32>
    %cst_8 = arith.constant dense<0.000000e+00> : vector<4x128xf32>
    %9 = tpu.matmul %7, %8, %cst_8 {dimension_numbers = #tpu.dot_dimension_numbers<[1], [0], [0], [1], [0, 0, 1, 1], [], []>} : vector<4x32xf32>, vector<32x128xf32>, vector<4x128xf32> -> vector<4x128xf32>
    %c0_9 = arith.constant 0 : index
    %c0_10 = arith.constant 0 : index
    %10 = vector.load %arg4[%c0_9, %c0_10] : memref<1x128xf32, #tpu.memory_space<vmem>>, vector<1x128xf32>
    %11 = vector.broadcast %10 : vector<1x128xf32> to vector<4x128xf32>
    %12 = arith.addf %9, %11 : vector<4x128xf32>
    %cst_11 = arith.constant dense<0xFF800000> : vector<4xf32>
    %13 = vector.multi_reduction <maximumf>, %12, %cst_11 [1] : vector<4x128xf32> to vector<4xf32>
    %14 = vector.shape_cast %13 : vector<4xf32> to vector<4x1xf32>
    %15 = vector.broadcast %14 : vector<4x1xf32> to vector<4x128xf32>
    %16 = arith.subf %12, %15 : vector<4x128xf32>
    %17 = math.exp %16 : vector<4x128xf32>
    %cst_12 = arith.constant dense<0.000000e+00> : vector<4xf32>
    %18 = vector.multi_reduction <add>, %17, %cst_12 [1] : vector<4x128xf32> to vector<4xf32>
    %19 = vector.shape_cast %18 : vector<4xf32> to vector<4x1xf32>
    %20 = vector.extract_strided_slice %17 {offsets = [0, 0], sizes = [4, 4], strides = [1, 1]} : vector<4x128xf32> to vector<4x4xf32>
    %21 = vector.broadcast %19 : vector<4x1xf32> to vector<4x4xf32>
    %22 = arith.divf %20, %21 : vector<4x4xf32>
    %c0_13 = arith.constant 0 : index
    %c0_14 = arith.constant 0 : index
    %23 = vector.load %arg5[%c0_13, %c0_14] : memref<4x4xf32, #tpu.memory_space<vmem>>, vector<4x4xf32>
    tpu.vector_store %arg5[%c0_13, %c0_14], %22 {strides = array<i32>} : memref<4x4xf32, #tpu.memory_space<vmem>>, vector<4x4xf32>,
    return
  }
}

</mosaic_0001>

<llo_original>
// kernel: tpu_custom_call.1
$region0: #{tpu_custom_call.1}
  #allocation0 [shape = 'u32[]', space=smem, size = 0x4, offset = 0x4, fixed_abs, tag = 'smem constant byte address 0x4 - core index']
  #allocation1 [shape = 'u32[144,128]{1,0:T(1,128)}', space=vmem, size = 0x12000, scoped, tag = 'internal scratch']
  %s0 = inlined_call_operand.hbm [shape: f32[4,8], index: 0, kind: input, shape index: {}]
  %s1 = inlined_call_operand.hbm [shape: f32[8,32], index: 1, kind: input, shape index: {}]
  %s2 = inlined_call_operand.vmem [shape: f32[1,32], index: 2, kind: input, shape index: {}]
  %s3 = inlined_call_operand.hbm [shape: f32[32,128], index: 3, kind: input, shape index: {}]
  %s4 = inlined_call_operand.vmem [shape: f32[1,128], index: 4, kind: input, shape index: {}]
  %s5 = inlined_call_operand.hbm [shape: f32[4,4], index: 5, kind: output, shape index: {}]
  %s6 = sld [smem:[#allocation0]]
  $region42: #{tpu_custom_call.1} parent=0
    _
  %s8 = ssub.s32 1, %s6
  %s9 = scalar_select 0, %s8, %s6
  $region1: #{tpu_custom_call.1} parent=0
    #allocation2 [shape = 'u8[2048]{0}', space=vmem, size = 0x800, scoped, tag = 'input window, operand 0, single buffered']
    #allocation3 [shape = 's32[1]{0}', space=sflag, size = 0x4, scoped, tag = 'scoped memory for tpu_custom_call.1']
    #allocation4 [shape = 's32[1]{0}', space=sflag, size = 0x4, scoped, tag = 'scoped memory for tpu_custom_call.1']
    #allocation5 [shape = 'u8[4096]{0}', space=vmem, size = 0x1000, scoped, tag = 'input window, operand 1, single buffered']
    #allocation6 [shape = 's32[1]{0}', space=sflag, size = 0x4, scoped, tag = 'scoped memory for tpu_custom_call.1']
    #allocation7 [shape = 'u8[16384]{0}', space=vmem, size = 0x4000, scoped, tag = 'input window, operand 3, single buffered']
    #allocation8 [shape = 'u8[2048]{0}', space=vmem, size = 0x800, scoped, tag = 'output window, operand 0, single buffered']
    %10 = vsyncpa [#allocation3], 0
    %11 = vsyncpa [#allocation6], 0
    %12 = vsyncpa [#allocation4], 0
    // Predicated region
    $region2: #{tpu_custom_call.1} parent=1 // pred_check
      _
    $region3: #{tpu_custom_call.1} parent=1 // pred_check_branch
      %14 = sbr.rel (0) target = $region5
    $region4: #{tpu_custom_call.1} parent=1 // pred_region
      %s16 = ssub.s32 64, 64
      %17 = vsyncadd [#allocation3], %s16
      %s19 = sshll.u32 [#allocation2], 4
      %s20 = int_to_ptr.vmem [resolvable:$true] %s19
      %22 = dma.hbm_to_vmem [thread:$0]  %s0, 64, %s20, [#allocation3]
    $region5: #{tpu_custom_call.1} parent=1 // pred_fallthru
      _
    // Predicated region
    $region6: #{tpu_custom_call.1} parent=1 // pred_check
      _
    $region7: #{tpu_custom_call.1} parent=1 // pred_check_branch
      %24 = sbr.rel (0) target = $region9
    $region8: #{tpu_custom_call.1} parent=1 // pred_region
      %s26 = ssub.s32 128, 128
      %27 = vsyncadd [#allocation6], %s26
      %s29 = sshll.u32 [#allocation5], 4
      %s30 = int_to_ptr.vmem [resolvable:$true] %s29
      %32 = dma.hbm_to_vmem [thread:$0]  %s1, 128, %s30, [#allocation6]
    $region9: #{tpu_custom_call.1} parent=1 // pred_fallthru
      _
    // Predicated region
    $region10: #{tpu_custom_call.1} parent=1 // pred_check
      _
    $region11: #{tpu_custom_call.1} parent=1 // pred_check_branch
      %34 = sbr.rel (0) target = $region13
    $region12: #{tpu_custom_call.1} parent=1 // pred_region
      _
    $region13: #{tpu_custom_call.1} parent=1 // pred_fallthru
      _
    // Predicated region
    $region14: #{tpu_custom_call.1} parent=1 // pred_check
      _
    $region15: #{tpu_custom_call.1} parent=1 // pred_check_branch
      %36 = sbr.rel (0) target = $region17
    $region16: #{tpu_custom_call.1} parent=1 // pred_region
      %s38 = ssub.s32 512, 512
      %39 = vsyncadd [#allocation6], %s38
      %s40 = sshll.u32 [#allocation7], 4
      %s41 = int_to_ptr.vmem [resolvable:$true] %s40
      %46 = dma.hbm_to_vmem [thread:$0]  %s3, 512, %s41, [#allocation6], 128, 128, 8
    $region17: #{tpu_custom_call.1} parent=1 // pred_fallthru
      _
    // Predicated region
    $region18: #{tpu_custom_call.1} parent=1 // pred_check
      _
    $region19: #{tpu_custom_call.1} parent=1 // pred_check_branch
      %48 = sbr.rel (0) target = $region21
    $region20: #{tpu_custom_call.1} parent=1 // pred_region
      _
    $region21: #{tpu_custom_call.1} parent=1 // pred_fallthru
      _
    // Predicated region
    $region22: #{tpu_custom_call.1} parent=1 // pred_check
      _
    $region23: #{tpu_custom_call.1} parent=1 // pred_check_branch
      %50 = sbr.rel (0) target = $region25
    $region24: #{tpu_custom_call.1} parent=1 // pred_region
      %51 = dma.done [#allocation3], 64
    $region25: #{tpu_custom_call.1} parent=1 // pred_fallthru
      _
    // Predicated region
    $region26: #{tpu_custom_call.1} parent=1 // pred_check
      _
    $region27: #{tpu_custom_call.1} parent=1 // pred_check_branch
      %53 = sbr.rel (0) target = $region29
    $region28: #{tpu_custom_call.1} parent=1 // pred_region
      %54 = dma.done [#allocation6], 128
    $region29: #{tpu_custom_call.1} parent=1 // pred_fallthru
      _
    // Predicated region
    $region30: #{tpu_custom_call.1} parent=1 // pred_check
      _
    $region31: #{tpu_custom_call.1} parent=1 // pred_check_branch
      %56 = sbr.rel (0) target = $region33
    $region32: #{tpu_custom_call.1} parent=1 // pred_region
      %57 = dma.done [#allocation6], 512
    $region33: #{tpu_custom_call.1} parent=1 // pred_fallthru
      _
    %v58 = vld [vmem:[#allocation2] sm:$0xf]
    %v59 = vld [vmem:[#allocation5] sm:$0xff]
    %v60 = vld [vmem:[%s2] sm:$0x1]
    %v62 = vlaneseq
    %v63 = vshrl.u32 %v62, 7
    %v64 = vsub.s32 0, %v63
    %v65 = vrot.slane %v60, %v64
    %vm67 = vcmask 64512
    %v69 = vsel %vm67, %v58, 0
    %71 = vmatprep.subr.mxu0 0.0
    %72 = vmatpush1.msra.mxu0 %v59
    %73 = vmatprep.subr.mxu0 0.0
    %74 = vmatpush1.msra.mxu0 0.0
    %75 = vmatprep.subr.mxu0 0.0
    %76 = vmatpush1.msra.mxu0 0.0
    %77 = vmatprep.subr.mxu0 0.0
    %78 = vmatpush1.msra.mxu0 0.0
    %79 = vmatprep.subr.mxu0 0.0
    %80 = vmatpush1.msra.mxu0 0.0
    %81 = vmatprep.subr.mxu0 0.0
    %82 = vmatpush1.msra.mxu0 0.0
    %83 = vmatprep.subr.mxu0 0.0
    %84 = vmatpush1.msra.mxu0 0.0
    %85 = vmatprep.subr.mxu0 0.0
    %86 = vmatpush1.msra.mxu0 0.0
    %87 = vmatprep.subr.mxu0 0.0
    %88 = vmatpush1.msra.mxu0 0.0
    %89 = vmatprep.subr.mxu0 0.0
    %90 = vmatpush1.msra.mxu0 0.0
    %91 = vmatprep.subr.mxu0 0.0
    %92 = vmatpush1.msra.mxu0 0.0
    %93 = vmatprep.subr.mxu0 0.0
    %94 = vmatpush1.msra.mxu0 0.0
    %95 = vmatprep.subr.mxu0 0.0
    %96 = vmatpush1.msra.mxu0 0.0
    %97 = vmatprep.subr.mxu0 0.0
    %98 = vmatpush1.msra.mxu0 0.0
    %99 = vmatprep.subr.mxu0 0.0
    %100 = vmatpush1.msra.mxu0 0.0
    %101 = vmatprep.subr.mxu0 0.0
    %102 = vmatpush1.msra.mxu0 0.0
    %103 = vmatprep.subr.mxu0 0.0
    %104 = vmatpush1.msra.mxu0 0.0
    %105 = vmatprep.subr.mxu0 0.0
    %106 = vmatpush1.msra.mxu0 0.0
    %107 = vmatprep.subr.mxu0 0.0
    %108 = vmatpush1.msra.mxu0 0.0
    %109 = vmatprep.subr.mxu0 0.0
    %110 = vmatpush1.msra.mxu0 0.0
    %111 = vmatprep.subr.mxu0 0.0
    %112 = vmatpush1.msra.mxu0 0.0
    %113 = vmatprep.subr.mxu0 0.0
    %114 = vmatpush1.msra.mxu0 0.0
    %115 = vmatprep.subr.mxu0 0.0
    %116 = vmatpush1.msra.mxu0 0.0
    %117 = vmatprep.subr.mxu0 0.0
    %118 = vmatpush1.msra.mxu0 0.0
    %119 = vmatprep.subr.mxu0 0.0
    %120 = vmatpush1.msra.mxu0 0.0
    %121 = vmatprep.subr.mxu0 0.0
    %122 = vmatpush1.msra.mxu0 0.0
    %123 = vmatprep.subr.mxu0 0.0
    %124 = vmatpush1.msra.mxu0 0.0
    %125 = vmatprep.subr.mxu0 0.0
    %126 = vmatpush1.msra.mxu0 0.0
    %127 = vmatprep.subr.mxu0 0.0
    %128 = vmatpush1.msra.mxu0 0.0
    %129 = vmatprep.subr.mxu0 0.0
    %130 = vmatpush1.msra.mxu0 0.0
    %131 = vmatprep.subr.mxu0 0.0
    %132 = vmatpush1.msra.mxu0 0.0
    %133 = vmatprep.subr.mxu0 0.0
    %134 = vmatpush1.msra.mxu0 0.0
    %135 = vmatprep.mubr.f32.mxu0 0.0
    %136 = vmatmul.mubr.f32.gmra.mrb[0].mxu0 %v69
    %v137 = vpop.f32.mrb[0].mxu0
    %v138 = vadd.f32 %v65, %v137
    %v139 = vpop.f32.mrb[0].mxu0
    %140 = vdwg.mxu0
    %v141 = vmax.f32 %v138, 0.0
    %v142 = vld [vmem:[#allocation7] sm:$0xff]
    %v143 = vld [vmem:[#allocation7 + $0x8] sm:$0xff]
    %v144 = vld [vmem:[#allocation7 + $0x10] sm:$0xff]
    %v145 = vld [vmem:[#allocation7 + $0x18] sm:$0xff]
    %v146 = vld [vmem:[%s4] sm:$0x1]
    %v148 = vlaneseq
    %v149 = vshrl.u32 %v148, 7
    %v150 = vsub.s32 0, %v149
    %v151 = vrot.slane %v146, %v150
    %vm153 = vcmask 261120
    %v155 = vsel %vm153, %v141, 0
    %157 = vmatprep.subr.mxu0 0.0
    %158 = vmatpush1.msra.mxu0 %v142
    %159 = vmatprep.subr.mxu0 0.0
    %160 = vmatpush1.msra.mxu0 %v143
    %161 = vmatprep.subr.mxu0 0.0
    %162 = vmatpush1.msra.mxu0 %v144
    %163 = vmatprep.subr.mxu0 0.0
    %164 = vmatpush1.msra.mxu0 %v145
    %165 = vmatprep.subr.mxu0 0.0
    %166 = vmatpush1.msra.mxu0 0.0
    %167 = vmatprep.subr.mxu0 0.0
    %168 = vmatpush1.msra.mxu0 0.0
    %169 = vmatprep.subr.mxu0 0.0
    %170 = vmatpush1.msra.mxu0 0.0
    %171 = vmatprep.subr.mxu0 0.0
    %172 = vmatpush1.msra.mxu0 0.0
    %173 = vmatprep.subr.mxu0 0.0
    %174 = vmatpush1.msra.mxu0 0.0
    %175 = vmatprep.subr.mxu0 0.0
    %176 = vmatpush1.msra.mxu0 0.0
    %177 = vmatprep.subr.mxu0 0.0
    %178 = vmatpush1.msra.mxu0 0.0
    %179 = vmatprep.subr.mxu0 0.0
    %180 = vmatpush1.msra.mxu0 0.0
    %181 = vmatprep.subr.mxu0 0.0
    %182 = vmatpush1.msra.mxu0 0.0
    %183 = vmatprep.subr.mxu0 0.0
    %184 = vmatpush1.msra.mxu0 0.0
    %185 = vmatprep.subr.mxu0 0.0
    %186 = vmatpush1.msra.mxu0 0.0
    %187 = vmatprep.subr.mxu0 0.0
    %188 = vmatpush1.msra.mxu0 0.0
    %189 = vmatprep.subr.mxu0 0.0
    %190 = vmatpush1.msra.mxu0 0.0
    %191 = vmatprep.subr.mxu0 0.0
    %192 = vmatpush1.msra.mxu0 0.0
    %193 = vmatprep.subr.mxu0 0.0
    %194 = vmatpush1.msra.mxu0 0.0
    %195 = vmatprep.subr.mxu0 0.0
    %196 = vmatpush1.msra.mxu0 0.0
    %197 = vmatprep.subr.mxu0 0.0
    %198 = vmatpush1.msra.mxu0 0.0
    %199 = vmatprep.subr.mxu0 0.0
    %200 = vmatpush1.msra.mxu0 0.0
    %201 = vmatprep.subr.mxu0 0.0
    %202 = vmatpush1.msra.mxu0 0.0
    %203 = vmatprep.subr.mxu0 0.0
    %204 = vmatpush1.msra.mxu0 0.0
    %205 = vmatprep.subr.mxu0 0.0
    %206 = vmatpush1.msra.mxu0 0.0
    %207 = vmatprep.subr.mxu0 0.0
    %208 = vmatpush1.msra.mxu0 0.0
    %209 = vmatprep.subr.mxu0 0.0
    %210 = vmatpush1.msra.mxu0 0.0
    %211 = vmatprep.subr.mxu0 0.0
    %212 = vmatpush1.msra.mxu0 0.0
    %213 = vmatprep.subr.mxu0 0.0
    %214 = vmatpush1.msra.mxu0 0.0
    %215 = vmatprep.subr.mxu0 0.0
    %216 = vmatpush1.msra.mxu0 0.0
    %217 = vmatprep.subr.mxu0 0.0
    %218 = vmatpush1.msra.mxu0 0.0
    %219 = vmatprep.subr.mxu0 0.0
    %220 = vmatpush1.msra.mxu0 0.0
    %221 = vmatprep.mubr.f32.mxu0 0.0
    %222 = vmatmul.mubr.f32.gmra.mrb[0].mxu0 %v155
    %v223 = vpop.f32.mrb[0].mxu0
    %v224 = vadd.f32 %v151, %v223
    %v225 = vpop.f32.mrb[0].mxu0
    %226 = vdwg.mxu0
    %vm227 = vcmask 1043456
    %v228 = vsel %vm227, %v224, -inf
    %229 = vmax.xlane.f32.xlu0 %v228
    %v230 = vpop.xlane.xlu0 %229
    %v231 = vsub.f32 %v224, %v230
    %v232 = vmul.f32 %v231, 1.442695
    %v233 = vpow.pop %v232
    %v234 = vsel %vm227, %v233, 0.0
    %235 = vadd.xlane.f32.xlu0 %v234
    %v236 = vpop.xlane.xlu0 %235
    %v237 = vrcp.pop %v236
    %v238 = vmul.f32 %v233, %v237
    %vm239 = vcmask 27648
    %240 = vst.msk [vmem:[#allocation8] sm:$0xf] %vm239, %v238
    // Predicated region
    $region34: #{tpu_custom_call.1} parent=1 // pred_check
      _
    $region35: #{tpu_custom_call.1} parent=1 // pred_check_branch
      %242 = sbr.rel (0) target = $region37
    $region36: #{tpu_custom_call.1} parent=1 // pred_region
      %s244 = ssub.s32 64, 64
      %245 = vsyncadd [#allocation4], %s244
      %s247 = sshll.u32 [#allocation8], 4
      %s248 = int_to_ptr.vmem [resolvable:$true] %s247
      %250 = dma.vmem_to_hbm [thread:$0]  %s248, 64, %s5, [#allocation4]
    $region37: #{tpu_custom_call.1} parent=1 // pred_fallthru
      _
    // Predicated region
    $region38: #{tpu_custom_call.1} parent=1 // pred_check
      _
    $region39: #{tpu_custom_call.1} parent=1 // pred_check_branch
      %252 = sbr.rel (0) target = $region41
    $region40: #{tpu_custom_call.1} parent=1 // pred_region
      %253 = dma.done [#allocation4], 64
    $region41: #{tpu_custom_call.1} parent=1 // pred_fallthru
      _
    %254 = vsyncpa [#allocation3], 1
    %255 = vsyncpa [#allocation6], 1
    %256 = vsyncpa [#allocation4], 1

</llo_original>
